<compile_context>
chip_gen: v7x
topology: tpu7x:2x2x1
jax: 0.10.0
libtpu: 0.0.40
codegen_flags: <defaults>
</compile_context>

<pallas_src>
import jax
import jax.numpy as jnp
from jax.experimental import pallas as pl
from jax.experimental.pallas import tpu as pltpu


def _round_up(x, m):
    return ((x + m - 1) // m) * m


def _pick_tile(padded_dim, candidates):
    """Largest candidate that divides padded_dim (padded_dim is a 128-multiple)."""
    for c in candidates:
        if c <= padded_dim and padded_dim % c == 0:
            return c
    return padded_dim


# ---------------------------------------------------------------------------
# Kernels
# ---------------------------------------------------------------------------

def _linear_kernel_single(x_ref, w_ref, b_ref, o_ref):
    """Whole contraction in one tile: no accumulator, single writeback."""
    o_ref[...] = (
        jnp.dot(x_ref[...], w_ref[...], preferred_element_type=jnp.float32)
        + b_ref[...]
    ).astype(o_ref.dtype)


def _linear_kernel_acc(x_ref, w_ref, b_ref, o_ref, acc_ref):
    """K-tiled contraction with f32 VMEM accumulator; one store per (i, j)."""
    k = pl.program_id(2)

    @pl.when(k == 0)
    def _():
        acc_ref[...] = jnp.zeros_like(acc_ref)

    acc_ref[...] += jnp.dot(
        x_ref[...], w_ref[...], preferred_element_type=jnp.float32
    )

    @pl.when(k == pl.num_programs(2) - 1)
    def _():
        o_ref[...] = (acc_ref[...] + b_ref[...]).astype(o_ref.dtype)


# ---------------------------------------------------------------------------
# One-time parameter preparation (call at init time, NOT per forward)
# ---------------------------------------------------------------------------

def prepare_linear_params(weight, bias, *, use_bf16_inputs=False):
    """Transpose to [IN, OUT], pad to lane/MXU-aligned tiles, cast. Done once."""
    OUT, IN = weight.shape
    Kp = _round_up(IN, 128)
    Np = _round_up(OUT, 128)
    tk = _pick_tile(Kp, (1024, 512, 256, 128))
    tn = _pick_tile(Np, (512, 256, 128))

    in_dtype = jnp.bfloat16 if use_bf16_inputs else weight.dtype

    w_t = weight.T.astype(in_dtype)                      # [IN, OUT]
    if (Kp, Np) == (IN, OUT):
        wp = w_t
    else:
        wp = jnp.zeros((Kp, Np), in_dtype).at[:IN, :OUT].set(w_t)

    b2d = bias.astype(jnp.float32).reshape(1, OUT)
    bp = b2d if Np == OUT else jnp.zeros((1, Np), jnp.float32).at[:, :OUT].set(b2d)

    return {
        "wp": wp,                    # [Kp, Np], kernel-ready layout
        "bp": bp,                    # [1, Np], f32
        "in_features": IN,
        "out_features": OUT,
        "tn": tn,
        "tk": tk,
        "in_dtype": in_dtype,
    }


def _vmem_limit_bytes(tm, tn, tk, itemsize):
    in_bytes = 2 * (tm * tk + tk * tn) * itemsize   # double-buffered x + w
    extra_w = tk * tn * itemsize                    # third weight buffer
    out_bytes = 2 * tm * tn * 4                     # double-buffered output (f32)
    acc_bytes = tm * tn * 4                         # accumulator scratch
    bias_bytes = 2 * tn * 4
    est = in_bytes + extra_w + out_bytes + acc_bytes + bias_bytes
    # headroom, but clamp so the same config is safe on v7x (64 MiB physical).
    return int(min(max(2 * est, 32 * 1024 * 1024), 48 * 1024 * 1024))


# ---------------------------------------------------------------------------
# Forward
# ---------------------------------------------------------------------------

def simple_nn_forward(x, params):
    """x: [B, IN] -> [B, OUT] float32, using prepared params."""
    wp, bp = params["wp"], params["bp"]
    IN, OUT = params["in_features"], params["out_features"]
    tn, tk, in_dtype = params["tn"], params["tk"], params["in_dtype"]

    B, IN_x = x.shape
    assert IN_x == IN, "x feature dim must match weight in_features"
    Kp, Np = wp.shape

    # Batch tile: big enough to amortise weight re-streaming, sublane-aligned.
    tm = min(_round_up(B, 8), 512)
    Mp = _round_up(B, tm)

    # Pad/cast x only if actually needed (skip extra HBM passes when aligned).
    if x.dtype != in_dtype:
        x = x.astype(in_dtype)
    if (Mp, Kp) != (B, IN):
        xp = jnp.zeros((Mp, Kp), in_dtype).at[:B, :IN].set(x)
    else:
        xp = x

    gm, gn, gk = Mp // tm, Np // tn, Kp // tk
    itemsize = jnp.dtype(in_dtype).itemsize

    flops = 2 * Mp * Np * Kp
    bytes_accessed = (
        xp.size * itemsize * gn        # x re-streamed per output-column tile
        + wp.size * itemsize * gm      # weight re-streamed per batch tile
        + bp.size * 4 * gm
        + Mp * Np * 4                  # output written once
    )
    cost = pl.CostEstimate(
        flops=flops, transcendentals=0, bytes_accessed=bytes_accessed
    )

    if gm == 1 and gn == 1 and gk == 1:
        # --- Small-problem fast path: one block, no grid machinery. ---------
        out_padded = pl.pallas_call(
            _linear_kernel_single,
            out_shape=jax.ShapeDtypeStruct((Mp, Np), jnp.float32),
            cost_estimate=cost,
        )(xp, wp, bp)

    elif gk == 1:
        # --- Single K step: 2-D grid, no accumulator scratch. ---------------
        out_padded = pl.pallas_call(
            _linear_kernel_single,
            out_shape=jax.ShapeDtypeStruct((Mp, Np), jnp.float32),
            grid_spec=pltpu.PrefetchScalarGridSpec(
                num_scalar_prefetch=0,
                grid=(gm, gn),
                in_specs=[
                    pl.BlockSpec((tm, tk), lambda i, j: (i, 0)),
                    pl.BlockSpec((tk, tn), lambda i, j: (0, j)),
                    pl.BlockSpec((1, tn), lambda i, j: (0, j)),
                ],
                out_specs=pl.BlockSpec((tm, tn), lambda i, j: (i, j)),
            ),
            compiler_params=pltpu.CompilerParams(
                dimension_semantics=("parallel", "parallel"),
                vmem_limit_bytes=_vmem_limit_bytes(tm, tn, tk, itemsize),
            ),
            cost_estimate=cost,
        )(xp, wp, bp)

    else:
        # --- General tiled path: K innermost, f32 accumulator, one store. ---
        out_padded = pl.pallas_call(
            _linear_kernel_acc,
            out_shape=jax.ShapeDtypeStruct((Mp, Np), jnp.float32),
            grid_spec=pltpu.PrefetchScalarGridSpec(
                num_scalar_prefetch=0,
                grid=(gm, gn, gk),
                in_specs=[
                    pl.BlockSpec((tm, tk), lambda i, j, k: (i, k)),
                    # Weight is the largest per-step DMA -> triple-buffer it.
                    pl.BlockSpec((tk, tn), lambda i, j, k: (k, j),
                                 pipeline_mode=pl.Buffered(3)),
                    pl.BlockSpec((1, tn), lambda i, j, k: (0, j)),
                ],
                out_specs=pl.BlockSpec((tm, tn), lambda i, j, k: (i, j)),
                scratch_shapes=[pltpu.VMEM((tm, tn), jnp.float32)],
            ),
            compiler_params=pltpu.CompilerParams(
                dimension_semantics=("parallel", "parallel", "arbitrary"),
                vmem_limit_bytes=_vmem_limit_bytes(tm, tn, tk, itemsize),
            ),
            cost_estimate=cost,
        )(xp, wp, bp)

    if (Mp, Np) == (B, OUT):
        return out_padded
    return out_padded[:B, :OUT]


# ---------------------------------------------------------------------------
# Test
# ---------------------------------------------------------------------------

if __name__ == "__main__":
    # Small shapes consistent with SimpleNN(input_size, output_size).
    batch, input_size, output_size = 2, 8, 32

    key = jax.random.PRNGKey(0)
    kx, kw, kb = jax.random.split(key, 3)

    # PyTorch nn.Linear default init: U(-1/sqrt(in), 1/sqrt(in)).
    bound = 1.0 / (input_size ** 0.5)
    weight = jax.random.uniform(
        kw, (output_size, input_size), jnp.float32, minval=-bound, maxval=bound
    )
    bias = jax.random.uniform(
        kb, (output_size,), jnp.float32, minval=-bound, maxval=bound
    )
    x = jax.random.normal(kx, (batch, input_size), jnp.float32)

    # One-time parameter prep (init time), then the kernel forward.
    params = prepare_linear_params(weight, bias, use_bf16_inputs=False)
    out = simple_nn_forward(x, params)
    out = jax.block_until_ready(out)

    # Reference check against plain JAX (same semantics as torch.nn.Linear).
    ref = x @ weight.T + bias
    assert out.shape == (batch, output_size)
    assert jnp.allclose(out, ref, atol=1e-5, rtol=1e-5), "mismatch vs reference"

    print("KERNEL_OK")
</pallas_src>

<mosaic_0001>
module attributes {stable_mosaic.version = 11 : i64} {
  func.func @_linear_kernel_single(%arg0: memref<8x128xf32, #tpu.memory_space<vmem>>, %arg1: memref<128x128xf32, #tpu.memory_space<vmem>>, %arg2: memref<1x128xf32, #tpu.memory_space<vmem>>, %arg3: memref<8x128xf32, #tpu.memory_space<vmem>>) attributes {dimension_semantics = [], scalar_prefetch = 0 : i64, scratch_operands = 0 : i64, tpu.core_type = #tpu.core_type<tc>} {
    %c0 = arith.constant 0 : index
    %c0_0 = arith.constant 0 : index
    %0 = vector.load %arg0[%c0, %c0_0] : memref<8x128xf32, #tpu.memory_space<vmem>>, vector<8x128xf32>
    %c0_1 = arith.constant 0 : index
    %c0_2 = arith.constant 0 : index
    %1 = vector.load %arg1[%c0_1, %c0_2] : memref<128x128xf32, #tpu.memory_space<vmem>>, vector<128x128xf32>
    %cst = arith.constant dense<0.000000e+00> : vector<8x128xf32>
    %2 = tpu.matmul %0, %1, %cst {dimension_numbers = #tpu.dot_dimension_numbers<[1], [0], [0], [1], [0, 0, 1, 1], [], []>} : vector<8x128xf32>, vector<128x128xf32>, vector<8x128xf32> -> vector<8x128xf32>
    %c0_3 = arith.constant 0 : index
    %c0_4 = arith.constant 0 : index
    %3 = vector.load %arg2[%c0_3, %c0_4] : memref<1x128xf32, #tpu.memory_space<vmem>>, vector<1x128xf32>
    %4 = vector.broadcast %3 : vector<1x128xf32> to vector<8x128xf32>
    %5 = arith.addf %2, %4 : vector<8x128xf32>
    %c0_5 = arith.constant 0 : index
    %c0_6 = arith.constant 0 : index
    %6 = vector.load %arg3[%c0_5, %c0_6] : memref<8x128xf32, #tpu.memory_space<vmem>>, vector<8x128xf32>
    tpu.vector_store %arg3[%c0_5, %c0_6], %5 {strides = array<i32>} : memref<8x128xf32, #tpu.memory_space<vmem>>, vector<8x128xf32>,
    return
  }
}

</mosaic_0001>

<llo_original>
// kernel: tpu_custom_call.1
$region0: #{tpu_custom_call.1}
  #allocation0 [shape = 'u32[]', space=smem, size = 0x4, offset = 0x4, fixed_abs, tag = 'smem constant byte address 0x4 - core index']
  #allocation1 [shape = 'u32[144,128]{1,0:T(1,128)}', space=vmem, size = 0x12000, scoped, tag = 'internal scratch']
  %s0 = inlined_call_operand.hbm [shape: f32[8,128], index: 0, kind: input, shape index: {}]
  %s1 = inlined_call_operand.hbm [shape: f32[128,128], index: 1, kind: input, shape index: {}]
  %s2 = inlined_call_operand.vmem [shape: f32[1,128], index: 2, kind: input, shape index: {}]
  %s3 = inlined_call_operand.hbm [shape: f32[8,128], index: 3, kind: output, shape index: {}]
  %s4 = sld [smem:[#allocation0]]
  $region30: #{tpu_custom_call.1} parent=0
    _
  %s6 = ssub.s32 1, %s4
  %s7 = scalar_select 0, %s6, %s4
  $region1: #{tpu_custom_call.1} parent=0
    #allocation2 [shape = 'u8[4096]{0}', space=vmem, size = 0x1000, scoped, tag = 'input window, operand 0, single buffered']
    #allocation3 [shape = 's32[1]{0}', space=sflag, size = 0x4, scoped, tag = 'scoped memory for tpu_custom_call.1']
    #allocation4 [shape = 's32[1]{0}', space=sflag, size = 0x4, scoped, tag = 'scoped memory for tpu_custom_call.1']
    #allocation5 [shape = 'u8[65536]{0}', space=vmem, size = 0x10000, scoped, tag = 'input window, operand 1, single buffered']
    #allocation6 [shape = 's32[1]{0}', space=sflag, size = 0x4, scoped, tag = 'scoped memory for tpu_custom_call.1']
    #allocation7 [shape = 'u8[4096]{0}', space=vmem, size = 0x1000, scoped, tag = 'output window, operand 0, single buffered']
    %8 = vsyncpa [#allocation3], 0
    %9 = vsyncpa [#allocation6], 0
    %10 = vsyncpa [#allocation4], 0
    // Predicated region
    $region2: #{tpu_custom_call.1} parent=1 // pred_check
      _
    $region3: #{tpu_custom_call.1} parent=1 // pred_check_branch
      %12 = sbr.rel (0) target = $region5
    $region4: #{tpu_custom_call.1} parent=1 // pred_region
      %s14 = ssub.s32 128, 128
      %15 = vsyncadd [#allocation3], %s14
      %s17 = sshll.u32 [#allocation2], 4
      %s18 = int_to_ptr.vmem [resolvable:$true] %s17
      %20 = dma.hbm_to_vmem [thread:$0]  %s0, 128, %s18, [#allocation3]
    $region5: #{tpu_custom_call.1} parent=1 // pred_fallthru
      _
    // Predicated region
    $region6: #{tpu_custom_call.1} parent=1 // pred_check
      _
    $region7: #{tpu_custom_call.1} parent=1 // pred_check_branch
      %22 = sbr.rel (0) target = $region9
    $region8: #{tpu_custom_call.1} parent=1 // pred_region
      %s24 = ssub.s32 2048, 2048
      %25 = vsyncadd [#allocation6], %s24
      %s26 = sshll.u32 [#allocation5], 4
      %s27 = int_to_ptr.vmem [resolvable:$true] %s26
      %32 = dma.hbm_to_vmem [thread:$0]  %s1, 2048, %s27, [#allocation6], 128, 128, 8
    $region9: #{tpu_custom_call.1} parent=1 // pred_fallthru
      _
    // Predicated region
    $region10: #{tpu_custom_call.1} parent=1 // pred_check
      _
    $region11: #{tpu_custom_call.1} parent=1 // pred_check_branch
      %34 = sbr.rel (0) target = $region13
    $region12: #{tpu_custom_call.1} parent=1 // pred_region
      _
    $region13: #{tpu_custom_call.1} parent=1 // pred_fallthru
      _
    // Predicated region
    $region14: #{tpu_custom_call.1} parent=1 // pred_check
      _
    $region15: #{tpu_custom_call.1} parent=1 // pred_check_branch
      %36 = sbr.rel (0) target = $region17
    $region16: #{tpu_custom_call.1} parent=1 // pred_region
      %37 = dma.done [#allocation3], 128
    $region17: #{tpu_custom_call.1} parent=1 // pred_fallthru
      _
    // Predicated region
    $region18: #{tpu_custom_call.1} parent=1 // pred_check
      _
    $region19: #{tpu_custom_call.1} parent=1 // pred_check_branch
      %39 = sbr.rel (0) target = $region21
    $region20: #{tpu_custom_call.1} parent=1 // pred_region
      %40 = dma.done [#allocation6], 2048
    $region21: #{tpu_custom_call.1} parent=1 // pred_fallthru
      _
    %v41 = vld [vmem:[#allocation2] sm:$0xff]
    %v42 = vld [vmem:[#allocation5] sm:$0xff]
    %v43 = vld [vmem:[#allocation5 + $0x8] sm:$0xff]
    %v44 = vld [vmem:[#allocation5 + $0x10] sm:$0xff]
    %v45 = vld [vmem:[#allocation5 + $0x18] sm:$0xff]
    %v46 = vld [vmem:[#allocation5 + $0x20] sm:$0xff]
    %v47 = vld [vmem:[#allocation5 + $0x28] sm:$0xff]
    %v48 = vld [vmem:[#allocation5 + $0x30] sm:$0xff]
    %v49 = vld [vmem:[#allocation5 + $0x38] sm:$0xff]
    %v50 = vld [vmem:[#allocation5 + $0x40] sm:$0xff]
    %v51 = vld [vmem:[#allocation5 + $0x48] sm:$0xff]
    %v52 = vld [vmem:[#allocation5 + $0x50] sm:$0xff]
    %v53 = vld [vmem:[#allocation5 + $0x58] sm:$0xff]
    %v54 = vld [vmem:[#allocation5 + $0x60] sm:$0xff]
    %v55 = vld [vmem:[#allocation5 + $0x68] sm:$0xff]
    %v56 = vld [vmem:[#allocation5 + $0x70] sm:$0xff]
    %v57 = vld [vmem:[#allocation5 + $0x78] sm:$0xff]
    %v58 = vld [vmem:[%s2] sm:$0x1]
    %v60 = vlaneseq
    %v61 = vshrl.u32 %v60, 7
    %v62 = vsub.s32 0, %v61
    %v63 = vrot.slane %v58, %v62
    %65 = vmatprep.subr.mxu0 0.0
    %66 = vmatpush1.msra.mxu0 %v42
    %67 = vmatprep.subr.mxu0 0.0
    %68 = vmatpush1.msra.mxu0 %v43
    %69 = vmatprep.subr.mxu0 0.0
    %70 = vmatpush1.msra.mxu0 %v44
    %71 = vmatprep.subr.mxu0 0.0
    %72 = vmatpush1.msra.mxu0 %v45
    %73 = vmatprep.subr.mxu0 0.0
    %74 = vmatpush1.msra.mxu0 %v46
    %75 = vmatprep.subr.mxu0 0.0
    %76 = vmatpush1.msra.mxu0 %v47
    %77 = vmatprep.subr.mxu0 0.0
    %78 = vmatpush1.msra.mxu0 %v48
    %79 = vmatprep.subr.mxu0 0.0
    %80 = vmatpush1.msra.mxu0 %v49
    %81 = vmatprep.subr.mxu0 0.0
    %82 = vmatpush1.msra.mxu0 %v50
    %83 = vmatprep.subr.mxu0 0.0
    %84 = vmatpush1.msra.mxu0 %v51
    %85 = vmatprep.subr.mxu0 0.0
    %86 = vmatpush1.msra.mxu0 %v52
    %87 = vmatprep.subr.mxu0 0.0
    %88 = vmatpush1.msra.mxu0 %v53
    %89 = vmatprep.subr.mxu0 0.0
    %90 = vmatpush1.msra.mxu0 %v54
    %91 = vmatprep.subr.mxu0 0.0
    %92 = vmatpush1.msra.mxu0 %v55
    %93 = vmatprep.subr.mxu0 0.0
    %94 = vmatpush1.msra.mxu0 %v56
    %95 = vmatprep.subr.mxu0 0.0
    %96 = vmatpush1.msra.mxu0 %v57
    %97 = vmatprep.subr.mxu0 0.0
    %98 = vmatpush1.msra.mxu0 0.0
    %99 = vmatprep.subr.mxu0 0.0
    %100 = vmatpush1.msra.mxu0 0.0
    %101 = vmatprep.subr.mxu0 0.0
    %102 = vmatpush1.msra.mxu0 0.0
    %103 = vmatprep.subr.mxu0 0.0
    %104 = vmatpush1.msra.mxu0 0.0
    %105 = vmatprep.subr.mxu0 0.0
    %106 = vmatpush1.msra.mxu0 0.0
    %107 = vmatprep.subr.mxu0 0.0
    %108 = vmatpush1.msra.mxu0 0.0
    %109 = vmatprep.subr.mxu0 0.0
    %110 = vmatpush1.msra.mxu0 0.0
    %111 = vmatprep.subr.mxu0 0.0
    %112 = vmatpush1.msra.mxu0 0.0
    %113 = vmatprep.subr.mxu0 0.0
    %114 = vmatpush1.msra.mxu0 0.0
    %115 = vmatprep.subr.mxu0 0.0
    %116 = vmatpush1.msra.mxu0 0.0
    %117 = vmatprep.subr.mxu0 0.0
    %118 = vmatpush1.msra.mxu0 0.0
    %119 = vmatprep.subr.mxu0 0.0
    %120 = vmatpush1.msra.mxu0 0.0
    %121 = vmatprep.subr.mxu0 0.0
    %122 = vmatpush1.msra.mxu0 0.0
    %123 = vmatprep.subr.mxu0 0.0
    %124 = vmatpush1.msra.mxu0 0.0
    %125 = vmatprep.subr.mxu0 0.0
    %126 = vmatpush1.msra.mxu0 0.0
    %127 = vmatprep.subr.mxu0 0.0
    %128 = vmatpush1.msra.mxu0 0.0
    %129 = vmatprep.mubr.f32.mxu0 0.0
    %130 = vmatmul.mubr.f32.gmra.mrb[0].mxu0 %v41
    %v131 = vpop.f32.mrb[0].mxu0
    %v132 = vadd.f32 %v63, %v131
    %v133 = vpop.f32.mrb[0].mxu0
    %134 = vdwg.mxu0
    %135 = vst [vmem:[#allocation7] sm:$0xff] %v132
    // Predicated region
    $region22: #{tpu_custom_call.1} parent=1 // pred_check
      _
    $region23: #{tpu_custom_call.1} parent=1 // pred_check_branch
      %137 = sbr.rel (0) target = $region25
    $region24: #{tpu_custom_call.1} parent=1 // pred_region
      %s139 = ssub.s32 128, 128
      %140 = vsyncadd [#allocation4], %s139
      %s142 = sshll.u32 [#allocation7], 4
      %s143 = int_to_ptr.vmem [resolvable:$true] %s142
      %145 = dma.vmem_to_hbm [thread:$0]  %s143, 128, %s3, [#allocation4]
    $region25: #{tpu_custom_call.1} parent=1 // pred_fallthru
      _
    // Predicated region
    $region26: #{tpu_custom_call.1} parent=1 // pred_check
      _
    $region27: #{tpu_custom_call.1} parent=1 // pred_check_branch
      %147 = sbr.rel (0) target = $region29
    $region28: #{tpu_custom_call.1} parent=1 // pred_region
      %148 = dma.done [#allocation4], 128
    $region29: #{tpu_custom_call.1} parent=1 // pred_fallthru
      _
    %149 = vsyncpa [#allocation3], 1
    %150 = vsyncpa [#allocation6], 1
    %151 = vsyncpa [#allocation4], 1

</llo_original>
